<compile_context>
chip_gen: v7x
topology: tpu7x:2x2x1
jax: 0.10.0
libtpu: 0.0.40
codegen_flags: <defaults>
</compile_context>

<pallas_src>
import jax
import jax.numpy as jnp
from jax.experimental import pallas as pl
from jax.experimental.pallas import tpu as pltpu


def _conv_bn_relu_kernel(w_ref, b_ref, p_ref, o_ref):
    # w_ref: (C_out, Kdim)  BN-scale-folded weights
    # b_ref: (C_out, 1)     BN bias (broadcast over lanes)
    # p_ref: (Kdim, TILE_S) im2col patches for this (sample, spatial tile)
    # o_ref: (C_out, TILE_S)
    acc = jax.lax.dot_general(
        w_ref[...], p_ref[...],
        dimension_numbers=(((1,), (0,)), ((), ())),
        preferred_element_type=jnp.float32,
        precision=jax.lax.Precision.HIGHEST,
    )
    y = acc + b_ref[...]              # folded BatchNorm (inference stats)
    o_ref[...] = jnp.maximum(y, 0.0).astype(o_ref.dtype)   # ReLU


def _pick_spatial_tile(s, cap=4096):
    """Largest multiple of 128 that divides s (<= cap); else the full extent."""
    best = None
    t = 128
    while t <= min(s, cap):
        if s % t == 0:
            best = t
        t += 128
    # TODO(synk): for huge S with no 128-multiple divisor this falls back to a full
    # (unpadded) block; a masked last tile would be nicer.
    return best if best is not None else s


def input_block_forward(x, weight, gamma, beta, running_mean, running_var,
                        *, stride=2, padding=3, eps=1e-3):
    """InputBlock forward: conv(bias=False) -> BN(eps, inference) -> ReLU.

    x:      (N, Cin, H, W)      NCHW, like the PyTorch module
    weight: (Cout, Cin, KH, KW) PyTorch Conv2d layout
    gamma/beta/running_mean/running_var: (Cout,)
    """
    N, Cin, H, W = x.shape
    Cout, _, KH, KW = weight.shape
    Hout = (H + 2 * padding - KH) // stride + 1
    Wout = (W + 2 * padding - KW) // stride + 1
    S = Hout * Wout
    Kdim = Cin * KH * KW

    # im2col in channel-major layout: (N, Cin*KH*KW, Hout, Wout) -> (N, Kdim, S).
    # Feature ordering matches weight.reshape(Cout, Cin*KH*KW).
    patches = jax.lax.conv_general_dilated_patches(
        x, filter_shape=(KH, KW),
        window_strides=(stride, stride),
        padding=((padding, padding), (padding, padding)),
        dimension_numbers=("NCHW", "OIHW", "NCHW"),
    ).reshape(N, Kdim, S)

    # Fold BN into the conv: y = conv*scale + bias, scale folded into the weights.
    scale = (gamma.astype(jnp.float32)
             * jax.lax.rsqrt(running_var.astype(jnp.float32) + eps))
    bias = beta.astype(jnp.float32) - running_mean.astype(jnp.float32) * scale
    w_mat = (weight.reshape(Cout, Kdim).astype(jnp.float32)
             * scale[:, None]).astype(x.dtype)
    bias2d = bias.reshape(Cout, 1)

    tile_s = _pick_spatial_tile(S)
    grid = (N, S // tile_s)

    out = pl.pallas_call(
        _conv_bn_relu_kernel,
        out_shape=jax.ShapeDtypeStruct((N, Cout, S), x.dtype),
        grid_spec=pltpu.PrefetchScalarGridSpec(
            num_scalar_prefetch=0,
            grid=grid,
            in_specs=[
                # weights / bias: tiny, same block every step
                pl.BlockSpec((Cout, Kdim), lambda n, s: (0, 0)),
                pl.BlockSpec((Cout, 1), lambda n, s: (0, 0)),
                # patches: squeeze the sample axis, lane-dense spatial tile
                pl.BlockSpec((None, Kdim, tile_s), lambda n, s: (n, 0, s)),
            ],
            out_specs=pl.BlockSpec((None, Cout, tile_s), lambda n, s: (n, 0, s)),
        ),
        compiler_params=pltpu.CompilerParams(
            dimension_semantics=("parallel", "parallel")),
    )(w_mat, bias2d, patches)

    # (N, Cout, S) -> (N, Cout, Hout, Wout): free reshape, no transpose.
    return out.reshape(N, Cout, Hout, Wout)


if __name__ == "__main__":
    key = jax.random.PRNGKey(0)
    k1, k2, k3, k4, k5, k6 = jax.random.split(key, 6)

    # InputBlock defaults: inchannels=1, kernel 7, stride 2, padding 3.
    N, Cin, H, W = 2, 1, 32, 32
    Cout, K, stride, pad = 32, 7, 2, 3

    x = jax.random.normal(k1, (N, Cin, H, W), dtype=jnp.float32)
    weight = 0.1 * jax.random.normal(k2, (Cout, Cin, K, K), dtype=jnp.float32)
    gamma = 1.0 + 0.1 * jax.random.normal(k3, (Cout,), dtype=jnp.float32)
    beta = 0.1 * jax.random.normal(k4, (Cout,), dtype=jnp.float32)
    running_mean = 0.05 * jax.random.normal(k5, (Cout,), dtype=jnp.float32)
    running_var = jnp.abs(1.0 + 0.1 * jax.random.normal(k6, (Cout,), dtype=jnp.float32))

    out = input_block_forward(x, weight, gamma, beta, running_mean, running_var,
                              stride=stride, padding=pad, eps=1e-3)
    out = jax.block_until_ready(out)

    # Pure-JAX reference: conv -> BN (inference) -> ReLU.
    conv = jax.lax.conv_general_dilated(
        x, weight, window_strides=(stride, stride),
        padding=((pad, pad), (pad, pad)),
        dimension_numbers=("NCHW", "OIHW", "NCHW"),
        precision=jax.lax.Precision.HIGHEST)
    c = lambda v: v.reshape(1, Cout, 1, 1)
    ref = (conv - c(running_mean)) * jax.lax.rsqrt(c(running_var) + 1e-3) * c(gamma) + c(beta)
    ref = jnp.maximum(ref, 0.0)

    Hout = (H + 2 * pad - K) // stride + 1
    assert out.shape == (N, Cout, Hout, Hout), out.shape
    max_err = float(jnp.max(jnp.abs(out - ref)))
    assert jnp.allclose(out, ref, atol=1e-4, rtol=1e-4), max_err
    print("KERNEL_OK")
</pallas_src>

<mosaic_0001>
module attributes {stable_mosaic.version = 11 : i64} {
  func.func @_conv_bn_relu_kernel(%arg0: i32, %arg1: i32, %arg2: memref<32x49xf32, #tpu.memory_space<vmem>>, %arg3: memref<32x1xf32, #tpu.memory_space<vmem>>, %arg4: memref<1x49x256xf32, #tpu.memory_space<vmem>>, %arg5: memref<1x32x256xf32, #tpu.memory_space<vmem>>) attributes {dimension_semantics = [#tpu.dimension_semantics<parallel>, #tpu.dimension_semantics<parallel>], iteration_bounds = array<i64: 2, 1>, scalar_prefetch = 0 : i64, scratch_operands = 0 : i64, tpu.core_type = #tpu.core_type<tc>, window_params = [{pipeline_mode = #tpu.pipeline_mode<synchronous>, transform_indices = @transform_0, window_bounds = array<i64: 32, 49>}, {pipeline_mode = #tpu.pipeline_mode<synchronous>, transform_indices = @transform_1, window_bounds = array<i64: 32, 1>}, {transform_indices = @transform_2, window_bounds = array<i64: 1, 49, 256>}, {transform_indices = @transform_3, window_bounds = array<i64: 1, 32, 256>}]} {
    %c0 = arith.constant 0 : index
    %c0_0 = arith.constant 0 : index
    %0 = vector.load %arg2[%c0, %c0_0] : memref<32x49xf32, #tpu.memory_space<vmem>>, vector<32x49xf32>
    %c0_1 = arith.constant 0 : index
    %c0_2 = arith.constant 0 : index
    %c0_3 = arith.constant 0 : index
    %1 = vector.load %arg4[%c0_1, %c0_2, %c0_3] : memref<1x49x256xf32, #tpu.memory_space<vmem>>, vector<1x49x256xf32>
    %2 = vector.shape_cast %1 : vector<1x49x256xf32> to vector<49x256xf32>
    %cst = arith.constant dense<0.000000e+00> : vector<32x256xf32>
    %3 = tpu.matmul %0, %2, %cst {dimension_numbers = #tpu.dot_dimension_numbers<[1], [0], [0], [1], [0, 0, 1, 1], [], []>, precision = #tpu.contract_precision<fp32>} : vector<32x49xf32>, vector<49x256xf32>, vector<32x256xf32> -> vector<32x256xf32>
    %c0_4 = arith.constant 0 : index
    %c0_5 = arith.constant 0 : index
    %4 = vector.load %arg3[%c0_4, %c0_5] : memref<32x1xf32, #tpu.memory_space<vmem>>, vector<32x1xf32>
    %5 = vector.broadcast %4 : vector<32x1xf32> to vector<32x256xf32>
    %6 = arith.addf %3, %5 : vector<32x256xf32>
    %cst_6 = arith.constant 0.000000e+00 : f32
    %7 = vector.broadcast %cst_6 : f32 to vector<32x256xf32>
    %8 = arith.maximumf %6, %7 : vector<32x256xf32>
    %c0_7 = arith.constant 0 : index
    %c0_8 = arith.constant 0 : index
    %c0_9 = arith.constant 0 : index
    %9 = vector.load %arg5[%c0_7, %c0_8, %c0_9] : memref<1x32x256xf32, #tpu.memory_space<vmem>>, vector<1x32x256xf32>
    %10 = vector.shape_cast %9 : vector<1x32x256xf32> to vector<32x256xf32>
    %11 = vector.shape_cast %8 : vector<32x256xf32> to vector<1x32x256xf32>
    tpu.vector_store %arg5[%c0_7, %c0_8, %c0_9], %11 {strides = array<i32>} : memref<1x32x256xf32, #tpu.memory_space<vmem>>, vector<1x32x256xf32>,
    return
  }
  func.func @transform_0(%arg0: i32, %arg1: i32) -> (i32, i32) {
    %c0_i32 = arith.constant 0 : i32
    %c0_i32_0 = arith.constant 0 : i32
    %c0_i32_1 = arith.constant 0 : i32
    return %c0_i32, %c0_i32_0 : i32, i32
  }
  func.func @transform_1(%arg0: i32, %arg1: i32) -> (i32, i32) {
    %c0_i32 = arith.constant 0 : i32
    %c0_i32_0 = arith.constant 0 : i32
    %c0_i32_1 = arith.constant 0 : i32
    return %c0_i32, %c0_i32_0 : i32, i32
  }
  func.func @transform_2(%arg0: i32, %arg1: i32) -> (i32, i32, i32) {
    %c0_i32 = arith.constant 0 : i32
    %c0_i32_0 = arith.constant 0 : i32
    return %arg0, %c0_i32, %arg1 : i32, i32, i32
  }
  func.func @transform_3(%arg0: i32, %arg1: i32) -> (i32, i32, i32) {
    %c0_i32 = arith.constant 0 : i32
    %c0_i32_0 = arith.constant 0 : i32
    return %arg0, %c0_i32, %arg1 : i32, i32, i32
  }
}

</mosaic_0001>

<llo_original>
// kernel: tpu_custom_call.1
$region0: #{tpu_custom_call.1}
  #allocation0 [shape = 'u32[]', space=smem, size = 0x4, offset = 0x4, fixed_abs, tag = 'smem constant byte address 0x4 - core index']
  #allocation1 [shape = 'u32[144,128]{1,0:T(1,128)}', space=vmem, size = 0x12000, scoped, tag = 'internal scratch']
  %s0 = inlined_call_operand.vmem [shape: f32[32,49], index: 0, kind: input, shape index: {}]
  %s1 = inlined_call_operand.vmem [shape: f32[32,1], index: 1, kind: input, shape index: {}]
  %s2 = inlined_call_operand.vmem [shape: f32[2,49,256], index: 2, kind: input, shape index: {}]
  %s3 = inlined_call_operand.hbm [shape: f32[2,32,256], index: 3, kind: output, shape index: {}]
  %s4 = sld [smem:[#allocation0]]
  $region45: #{tpu_custom_call.1} parent=0
    _
  %s6 = ssub.s32 1, %s4
  %s7 = scalar_select 0, %s6, %s4
  $region1: #{tpu_custom_call.1} parent=0
    #allocation2 [shape = 'u8[65536]{0}', space=vmem, size = 0x10000, scoped, tag = 'output window, operand 0']
    #allocation3 [shape = 's32[2]{0}', space=sflag, size = 0x8, scoped, tag = 'scoped memory for tpu_custom_call.1']
    %8 = vsyncpa [#allocation3], 0
    %s9 = scalar_lea.sflag [#allocation3], 1
    %10 = vsyncpa %s9, 0
    loop: start=0, step=1, limit=4
    $region2: #{tpu_custom_call.1} parent=1 // loop_pre_header
      _
    $region3: #{tpu_custom_call.1} parent=1 // loop_header
      %s12 = sphi 0, %s16
      %p13 = scmp.ge.s32.totalorder %s12, 4
      %s19 = sphi 0, %s31
      %s20 = sphi 0, %s27
      %s21 = sphi 0, %s19
      %s22 = sphi 0, %s20
      %s23 = sphi 0, %s21
      %s24 = sphi 0, %s22
      %s32 = sphi 0, %s32
      %s34 = sphi 0, %s32
      %s35 = sphi 0, %s34
      %s49 = sphi 0, %s35
      %s53 = sphi 0, %s53
      %s55 = sphi 0, %s53
      %s56 = sphi 0, %s55
      %s70 = sphi 0, %s56
      %s78 = sphi 0, %s80
      %s81 = sphi 0, %s78
      %s82 = sphi 0, %s81
      %s98 = sphi 0, %s82
      %s106 = sphi 0, %s108
      %s109 = sphi 0, %s106
      %s110 = sphi 0, %s109
      %s126 = sphi 0, %s110
    $region4: #{tpu_custom_call.1} parent=1 // loop_header_branch
      %15 = sbr.rel (%p13) target = $region8
    $region5: #{tpu_custom_call.1} parent=1 // loop_body
      %s17 = ssub.s32 %s12, 1
      %s18 = ssub.s32 %s12, 2
      %s25 = sadd.s32 1, %s20
      %p26 = scmp.ge.s32.totalorder %s25, 1
      %s27 = scalar_select %p26, 0, %s25
      %s28 = sadd.s32 1, %s19
      %s29 = scalar_select %p26, %s28, %s19
      %p30 = scmp.ge.s32.totalorder %s29, 2
      %s31 = scalar_select %p30, 0, %s29
      %s33 = sadd.s32 %s32, 1
      %p36 = scmp.eq.s32.totalorder %s12, 1
      %p37 = scmp.ne.s32.totalorder %s32, %s34
      %p38 = scmp.eq.s32.totalorder %s12, 0
      %p39 = por %p37, %p38
      %p40 = scmp.ne.s32.totalorder %s32, %s34
      %p41 = scmp.eq.s32.totalorder %s17, 1
      %p42 = por %p40, %p41
      %p43 = scmp.ne.s32.totalorder %s34, %s35
      %p44 = scmp.eq.s32.totalorder %s17, 0
      %p45 = por %p43, %p44
      %p46 = scmp.ne.s32.totalorder %s34, %s35
      %p47 = scmp.eq.s32.totalorder %s18, 1
      %p48 = por %p46, %p47
      %p50 = scmp.ne.s32.totalorder %s35, %s49
      %p51 = scmp.eq.s32.totalorder %s18, 0
      %p52 = por %p50, %p51
      %s54 = sadd.s32 %s53, 1
      %p57 = scmp.eq.s32.totalorder %s12, 1
      %p58 = scmp.ne.s32.totalorder %s53, %s55
      %p59 = scmp.eq.s32.totalorder %s12, 0
      %p60 = por %p58, %p59
      %p61 = scmp.ne.s32.totalorder %s53, %s55
      %p62 = scmp.eq.s32.totalorder %s17, 1
      %p63 = por %p61, %p62
      %p64 = scmp.ne.s32.totalorder %s55, %s56
      %p65 = scmp.eq.s32.totalorder %s17, 0
      %p66 = por %p64, %p65
      %p67 = scmp.ne.s32.totalorder %s55, %s56
      %p68 = scmp.eq.s32.totalorder %s18, 1
      %p69 = por %p67, %p68
      %p71 = scmp.ne.s32.totalorder %s56, %s70
      %p72 = scmp.eq.s32.totalorder %s18, 0
      %p73 = por %p71, %p72
      %s74 = ssub.s32 %s19, %s31
      %s75 = ssub.s32 %s20, %s27
      %s76 = sor.u32 %s74, %s75
      %p77 = scmp.eq.s32.totalorder %s76, 0
      %s79 = sadd.s32 %s78, 1
      %s80 = scalar_select %p77, %s78, %s79
      %p83 = pneg %p77
      %p84 = scmp.eq.s32.totalorder %s12, 1
      %p85 = por %p83, %p84
      %p86 = scmp.ne.s32.totalorder %s78, %s81
      %p87 = scmp.eq.s32.totalorder %s12, 0
      %p88 = por %p86, %p87
      %p89 = scmp.ne.s32.totalorder %s78, %s81
      %p90 = scmp.eq.s32.totalorder %s17, 1
      %p91 = por %p89, %p90
      %p92 = scmp.ne.s32.totalorder %s81, %s82
      %p93 = scmp.eq.s32.totalorder %s17, 0
      %p94 = por %p92, %p93
      %p95 = scmp.ne.s32.totalorder %s81, %s82
      %p96 = scmp.eq.s32.totalorder %s18, 1
      %p97 = por %p95, %p96
      %p99 = scmp.ne.s32.totalorder %s82, %s98
      %p100 = scmp.eq.s32.totalorder %s18, 0
      %p101 = por %p99, %p100
      %s102 = ssub.s32 %s19, %s31
      %s103 = ssub.s32 %s20, %s27
      %s104 = sor.u32 %s102, %s103
      %p105 = scmp.eq.s32.totalorder %s104, 0
      %s107 = sadd.s32 %s106, 1
      %s108 = scalar_select %p105, %s106, %s107
      %p111 = pneg %p105
      %p112 = scmp.eq.s32.totalorder %s12, 1
      %p113 = por %p111, %p112
      %p114 = scmp.ne.s32.totalorder %s106, %s109
      %p115 = scmp.eq.s32.totalorder %s12, 0
      %p116 = por %p114, %p115
      %p117 = scmp.ne.s32.totalorder %s106, %s109
      %p118 = scmp.eq.s32.totalorder %s17, 1
      %p119 = por %p117, %p118
      %p120 = scmp.ne.s32.totalorder %s109, %s110
      %p121 = scmp.eq.s32.totalorder %s17, 0
      %p122 = por %p120, %p121
      %p123 = scmp.ne.s32.totalorder %s109, %s110
      %p124 = scmp.eq.s32.totalorder %s18, 1
      %p125 = por %p123, %p124
      %p127 = scmp.ne.s32.totalorder %s110, %s126
      %p128 = scmp.eq.s32.totalorder %s18, 0
      %p129 = por %p127, %p128
      %p130 = scmp.le.s32.totalorder 1, %s12
      %p131 = scmp.lt.s32.totalorder %s12, 3
      %p132 = pnand %p130, %p131
      %p133 = pneg %p132
      // Predicated region
      $region9: #{tpu_custom_call.1} parent=5 // pred_check
        _
      $region10: #{tpu_custom_call.1} parent=5 // pred_check_branch
        %135 = sbr.rel (%p132) target = $region12
      $region11: #{tpu_custom_call.1} parent=5 // pred_region
        %s136 = ssub.s32 %s12, 1
        // Predicated region
        $region13: #{tpu_custom_call.1} parent=11 // pred_check
          %p137 = pneg %p45
        $region14: #{tpu_custom_call.1} parent=11 // pred_check_branch
          %139 = sbr.rel (%p137) target = $region16
        $region15: #{tpu_custom_call.1} parent=11 // pred_region
          _
        $region16: #{tpu_custom_call.1} parent=11 // pred_fallthru
          _
        // Predicated region
        $region17: #{tpu_custom_call.1} parent=11 // pred_check
          %p140 = pneg %p66
        $region18: #{tpu_custom_call.1} parent=11 // pred_check_branch
          %142 = sbr.rel (%p140) target = $region20
        $region19: #{tpu_custom_call.1} parent=11 // pred_region
          _
        $region20: #{tpu_custom_call.1} parent=11 // pred_fallthru
          _
      $region12: #{tpu_custom_call.1} parent=5 // pred_fallthru
        _
      %p143 = scmp.lt.s32.totalorder %s12, 2
      // Predicated region
      $region21: #{tpu_custom_call.1} parent=5 // pred_check
        %p144 = pneg %p143
      $region22: #{tpu_custom_call.1} parent=5 // pred_check_branch
        %146 = sbr.rel (%p144) target = $region24
      $region23: #{tpu_custom_call.1} parent=5 // pred_region
        // Predicated region
        $region25: #{tpu_custom_call.1} parent=23 // pred_check
          %p147 = pneg %p88
        $region26: #{tpu_custom_call.1} parent=23 // pred_check_branch
          %149 = sbr.rel (%p147) target = $region28
        $region27: #{tpu_custom_call.1} parent=23 // pred_region
          %s150 = smul.u32 2, %s20
          %p151 = scmp.lt.s32.totalorder %s19, 1
          %s152 = scalar_select %p151, %s19, 1
          %p153 = scmp.lt.s32.totalorder %s150, 1
          %s154 = scalar_select %p153, %s150, 1
          %s155 = smul.addr %s152, 14
          %s156 = sadd.s32 %s154, %s155
          %s157 = smul.addr %s156, 8
          %s158 = scalar_lea.vmem %s2, %s157
          %s159 = smul.u32 2, %s20
        $region28: #{tpu_custom_call.1} parent=23 // pred_fallthru
          _
      $region24: #{tpu_custom_call.1} parent=5 // pred_fallthru
        _
      %p160 = scmp.le.s32.totalorder 1, %s12
      %p161 = scmp.lt.s32.totalorder %s12, 3
      %p162 = pnand %p160, %p161
      %p163 = pneg %p162
      // Predicated region
      $region29: #{tpu_custom_call.1} parent=5 // pred_check
        _
      $region30: #{tpu_custom_call.1} parent=5 // pred_check_branch
        %165 = sbr.rel (%p162) target = $region32
      $region31: #{tpu_custom_call.1} parent=5 // pred_region
        %s166 = ssub.s32 %s12, 1
        %p167 = pneg %p45
        %p168 = pneg %p42
        %p169 = pneg %p66
        %p170 = pneg %p63
        %s171 = smul.u32 2, %s22
        %p172 = scmp.lt.s32.totalorder %s21, 1
        %s173 = scalar_select %p172, %s21, 1
        %p174 = scmp.lt.s32.totalorder %s171, 1
        %s175 = scalar_select %p174, %s171, 1
        %s176 = smul.addr %s173, 14
        %s177 = sadd.s32 %s175, %s176
        %s178 = smul.addr %s177, 8
        %s179 = scalar_lea.vmem %s2, %s178
        %p180 = pneg %p94
        %p181 = pneg %p91
        %p182 = pneg %p122
        %p183 = pneg %p119
        %s184 = sand.u32 %s109, 1
        %s185 = scalar_lea.sflag [#allocation3], %s184
        %s186 = sand.u32 %s109, 1
        %s187 = smul.addr %s186, 64
        %s188 = scalar_lea.vmem [#allocation2], %s187
        %s189 = smul.u32 2, %s22
        %p190 = scmp.lt.s32.totalorder %s21, 1
        %s191 = scalar_select %p190, %s21, 1
        %p192 = scmp.lt.s32.totalorder %s189, 1
        %s193 = scalar_select %p192, %s189, 1
        %s194 = smul.addr %s191, 14
        %s195 = sadd.s32 %s193, %s194
        %s196 = smul.addr %s195, 8
        %s197 = scalar_lea.vmem %s2, %s196
        %s198 = smul.u32 2, %s22
        %s199 = smul.u32 2, %s22
        %v200 = vld [vmem:[%s0] sm:$0xff]
        %v201 = vld [vmem:[%s0 + $0x8] sm:$0xff]
        %v202 = vld [vmem:[%s0 + $0x10] sm:$0xff]
        %v203 = vld [vmem:[%s0 + $0x18] sm:$0xff]
        %v204 = vld [vmem:[%s197] sm:$0xff]
        %v205 = vld [vmem:[%s197 + $0x8] sm:$0xff]
        %v206 = vld [vmem:[%s197 + $0x10] sm:$0xff]
        %v207 = vld [vmem:[%s197 + $0x18] sm:$0xff]
        %v208 = vld [vmem:[%s197 + $0x20] sm:$0xff]
        %v209 = vld [vmem:[%s197 + $0x28] sm:$0xff]
        %v210 = vld [vmem:[%s197 + $0x30] sm:$0xff]
        %v211 = vld [vmem:[%s197 + $0x38] sm:$0xff]
        %v212 = vld [vmem:[%s197 + $0x40] sm:$0xff]
        %v213 = vld [vmem:[%s197 + $0x48] sm:$0xff]
        %v214 = vld [vmem:[%s197 + $0x50] sm:$0xff]
        %v215 = vld [vmem:[%s197 + $0x58] sm:$0xff]
        %v216 = vld [vmem:[%s197 + $0x60] sm:$0x1]
        %v217 = vld [vmem:[%s197 + $0x68] sm:$0x1]
        %v218 = vld [vmem:[%s1] sm:$0xff]
        %v219 = vld [vmem:[%s1 + $0x8] sm:$0xff]
        %v220 = vld [vmem:[%s1 + $0x10] sm:$0xff]
        %v221 = vld [vmem:[%s1 + $0x18] sm:$0xff]
        %223 = vset.pattern.permute.xlu0 0
        %224 = vperm.xlu0 %223, %v218
        %v225 = vpop.permute.xlu0 %224
        %228 = vset.pattern.permute.xlu0 0
        %229 = vperm.xlu0 %228, %v219
        %v230 = vpop.permute.xlu0 %229
        %233 = vset.pattern.permute.xlu0 0
        %234 = vperm.xlu0 %233, %v220
        %v235 = vpop.permute.xlu0 %234
        %238 = vset.pattern.permute.xlu0 0
        %239 = vperm.xlu0 %238, %v221
        %v240 = vpop.permute.xlu0 %239
        %vm242 = vcmask 400384
        %v244 = vsel %vm242, %v200, 0
        %v247 = vsel %vm242, %v201, 0
        %v250 = vsel %vm242, %v202, 0
        %v253 = vsel %vm242, %v203, 0
        %vm255 = vcmask 1040384
        %v257 = vsel %vm255, %v216, 0
        %v260 = vsel %vm255, %v217, 0
        %v262 = vand.u32 %v205, 4294901760
        %263 = vmatprep.subr.mxu0 %v262
        %v264 = vand.u32 %v204, 4294901760
        %265 = vmatpush1.msra.mxu0 %v264
        %v266 = vand.u32 %v207, 4294901760
        %267 = vmatprep.subr.mxu0 %v266
        %v268 = vand.u32 %v206, 4294901760
        %269 = vmatpush1.msra.mxu0 %v268
        %v270 = vand.u32 %v209, 4294901760
        %271 = vmatprep.subr.mxu0 %v270
        %v272 = vand.u32 %v208, 4294901760
        %273 = vmatpush1.msra.mxu0 %v272
        %v274 = vand.u32 %v211, 4294901760
        %275 = vmatprep.subr.mxu0 %v274
        %v276 = vand.u32 %v210, 4294901760
        %277 = vmatpush1.msra.mxu0 %v276
        %v278 = vand.u32 %v213, 4294901760
        %279 = vmatprep.subr.mxu0 %v278
        %v280 = vand.u32 %v212, 4294901760
        %281 = vmatpush1.msra.mxu0 %v280
        %v282 = vand.u32 %v215, 4294901760
        %283 = vmatprep.subr.mxu0 %v282
        %v284 = vand.u32 %v214, 4294901760
        %285 = vmatpush1.msra.mxu0 %v284
        %v286 = vand.u32 %v260, 4294901760
        %287 = vmatprep.subr.mxu0 %v286
        %v288 = vand.u32 %v257, 4294901760
        %289 = vmatpush1.msra.mxu0 %v288
        %290 = vmatprep.subr.mxu0 0.0
        %291 = vmatpush1.msra.mxu0 0.0
        %292 = vmatprep.subr.mxu0 0.0
        %293 = vmatpush1.msra.mxu0 0.0
        %294 = vmatprep.subr.mxu0 0.0
        %295 = vmatpush1.msra.mxu0 0.0
        %296 = vmatprep.subr.mxu0 0.0
        %297 = vmatpush1.msra.mxu0 0.0
        %298 = vmatprep.subr.mxu0 0.0
        %299 = vmatpush1.msra.mxu0 0.0
        %300 = vmatprep.subr.mxu0 0.0
        %301 = vmatpush1.msra.mxu0 0.0
        %302 = vmatprep.subr.mxu0 0.0
        %303 = vmatpush1.msra.mxu0 0.0
        %304 = vmatprep.subr.mxu0 0.0
        %305 = vmatpush1.msra.mxu0 0.0
        %306 = vmatprep.subr.mxu0 0.0
        %307 = vmatpush1.msra.mxu0 0.0
        %308 = vmatprep.subr.mxu0 0.0
        %309 = vmatpush1.msra.mxu0 0.0
        %310 = vmatprep.subr.mxu0 0.0
        %311 = vmatpush1.msra.mxu0 0.0
        %312 = vmatprep.subr.mxu0 0.0
        %313 = vmatpush1.msra.mxu0 0.0
        %314 = vmatprep.subr.mxu0 0.0
        %315 = vmatpush1.msra.mxu0 0.0
        %316 = vmatprep.subr.mxu0 0.0
        %317 = vmatpush1.msra.mxu0 0.0
        %318 = vmatprep.subr.mxu0 0.0
        %319 = vmatpush1.msra.mxu0 0.0
        %320 = vmatprep.subr.mxu0 0.0
        %321 = vmatpush1.msra.mxu0 0.0
        %322 = vmatprep.subr.mxu0 0.0
        %323 = vmatpush1.msra.mxu0 0.0
        %324 = vmatprep.subr.mxu0 0.0
        %325 = vmatpush1.msra.mxu0 0.0
        %326 = vmatprep.subr.mxu0 0.0
        %327 = vmatpush1.msra.mxu0 0.0
        %328 = vmatprep.subr.mxu0 0.0
        %329 = vmatpush1.msra.mxu0 0.0
        %330 = vmatprep.subr.mxu0 0.0
        %331 = vmatpush1.msra.mxu0 0.0
        %332 = vmatprep.subr.mxu0 0.0
        %333 = vmatpush1.msra.mxu0 0.0
        %334 = vmatprep.subr.mxu0 0.0
        %335 = vmatpush1.msra.mxu0 0.0
        %336 = vmatprep.subr.mxu0 0.0
        %337 = vmatpush1.msra.mxu0 0.0
        %338 = vmatprep.subr.mxu0 0.0
        %339 = vmatpush1.msra.mxu0 0.0
        %340 = vmatprep.mubr.f32.mxu0 0.0
        %v341 = vand.u32 %v244, 4294901760
        %v342 = vsub.f32 %v244, %v341
        %v343 = vand.u32 %v342, 4294901760
        %v344 = vsub.f32 %v342, %v343
        %v345 = vand.u32 %v344, 4294901760
        %346 = vmatmul.mubr.f32.gmra.mrb[0].mxu0 %v345
        %v347 = vpop.f32.mrb[0].mxu0
        %v348 = vadd.f32 %v225, %v347
        %v349 = vpop.f32.mrb[0].mxu0
        %v350 = vadd.f32 %v225, %v349
        %351 = vmatprep.mubr.f32.mxu0 0.0
        %v352 = vand.u32 %v247, 4294901760
        %v353 = vsub.f32 %v247, %v352
        %v354 = vand.u32 %v353, 4294901760
        %v355 = vsub.f32 %v353, %v354
        %v356 = vand.u32 %v355, 4294901760
        %357 = vmatmul.mubr.f32.gmra.mrb[0].mxu0 %v356
        %v358 = vpop.f32.mrb[0].mxu0
        %v359 = vadd.f32 %v230, %v358
        %v360 = vpop.f32.mrb[0].mxu0
        %v361 = vadd.f32 %v230, %v360
        %362 = vmatprep.mubr.f32.mxu0 0.0
        %v363 = vand.u32 %v250, 4294901760
        %v364 = vsub.f32 %v250, %v363
        %v365 = vand.u32 %v364, 4294901760
        %v366 = vsub.f32 %v364, %v365
        %v367 = vand.u32 %v366, 4294901760
        %368 = vmatmul.mubr.f32.gmra.mrb[0].mxu0 %v367
        %v369 = vpop.f32.mrb[0].mxu0
        %v370 = vadd.f32 %v235, %v369
        %v371 = vpop.f32.mrb[0].mxu0
        %v372 = vadd.f32 %v235, %v371
        %373 = vmatprep.mubr.f32.mxu0 0.0
        %v374 = vand.u32 %v253, 4294901760
        %v375 = vsub.f32 %v253, %v374
        %v376 = vand.u32 %v375, 4294901760
        %v377 = vsub.f32 %v375, %v376
        %v378 = vand.u32 %v377, 4294901760
        %379 = vmatmul.mubr.f32.gmra.mrb[0].mxu0 %v378
        %v380 = vpop.f32.mrb[0].mxu0
        %v381 = vadd.f32 %v240, %v380
        %v382 = vpop.f32.mrb[0].mxu0
        %v383 = vadd.f32 %v240, %v382
        %384 = vdwg.mxu0
        %v385 = vand.u32 %v205, 4294901760
        %v386 = vsub.f32 %v205, %v385
        %v387 = vand.u32 %v386, 4294901760
        %v388 = vsub.f32 %v386, %v387
        %v389 = vand.u32 %v388, 4294901760
        %390 = vmatprep.subr.mxu0 %v389
        %v391 = vand.u32 %v204, 4294901760
        %v392 = vsub.f32 %v204, %v391
        %v393 = vand.u32 %v392, 4294901760
        %v394 = vsub.f32 %v392, %v393
        %v395 = vand.u32 %v394, 4294901760
        %396 = vmatpush1.msra.mxu0 %v395
        %v397 = vand.u32 %v207, 4294901760
        %v398 = vsub.f32 %v207, %v397
        %v399 = vand.u32 %v398, 4294901760
        %v400 = vsub.f32 %v398, %v399
        %v401 = vand.u32 %v400, 4294901760
        %402 = vmatprep.subr.mxu0 %v401
        %v403 = vand.u32 %v206, 4294901760
        %v404 = vsub.f32 %v206, %v403
        %v405 = vand.u32 %v404, 4294901760
        %v406 = vsub.f32 %v404, %v405
        %v407 = vand.u32 %v406, 4294901760
        %408 = vmatpush1.msra.mxu0 %v407
        %v409 = vand.u32 %v209, 4294901760
        %v410 = vsub.f32 %v209, %v409
        %v411 = vand.u32 %v410, 4294901760
        %v412 = vsub.f32 %v410, %v411
        %v413 = vand.u32 %v412, 4294901760
        %414 = vmatprep.subr.mxu0 %v413
        %v415 = vand.u32 %v208, 4294901760
        %v416 = vsub.f32 %v208, %v415
        %v417 = vand.u32 %v416, 4294901760
        %v418 = vsub.f32 %v416, %v417
        %v419 = vand.u32 %v418, 4294901760
        %420 = vmatpush1.msra.mxu0 %v419
        %v421 = vand.u32 %v211, 4294901760
        %v422 = vsub.f32 %v211, %v421
        %v423 = vand.u32 %v422, 4294901760
        %v424 = vsub.f32 %v422, %v423
        %v425 = vand.u32 %v424, 4294901760
        %426 = vmatprep.subr.mxu0 %v425
        %v427 = vand.u32 %v210, 4294901760
        %v428 = vsub.f32 %v210, %v427
        %v429 = vand.u32 %v428, 4294901760
        %v430 = vsub.f32 %v428, %v429
        %v431 = vand.u32 %v430, 4294901760
        %432 = vmatpush1.msra.mxu0 %v431
        %v433 = vand.u32 %v213, 4294901760
        %v434 = vsub.f32 %v213, %v433
        %v435 = vand.u32 %v434, 4294901760
        %v436 = vsub.f32 %v434, %v435
        %v437 = vand.u32 %v436, 4294901760
        %438 = vmatprep.subr.mxu0 %v437
        %v439 = vand.u32 %v212, 4294901760
        %v440 = vsub.f32 %v212, %v439
        %v441 = vand.u32 %v440, 4294901760
        %v442 = vsub.f32 %v440, %v441
        %v443 = vand.u32 %v442, 4294901760
        %444 = vmatpush1.msra.mxu0 %v443
        %v445 = vand.u32 %v215, 4294901760
        %v446 = vsub.f32 %v215, %v445
        %v447 = vand.u32 %v446, 4294901760
        %v448 = vsub.f32 %v446, %v447
        %v449 = vand.u32 %v448, 4294901760
        %450 = vmatprep.subr.mxu0 %v449
        %v451 = vand.u32 %v214, 4294901760
        %v452 = vsub.f32 %v214, %v451
        %v453 = vand.u32 %v452, 4294901760
        %v454 = vsub.f32 %v452, %v453
        %v455 = vand.u32 %v454, 4294901760
        %456 = vmatpush1.msra.mxu0 %v455
        %v457 = vand.u32 %v260, 4294901760
        %v458 = vsub.f32 %v260, %v457
        %v459 = vand.u32 %v458, 4294901760
        %v460 = vsub.f32 %v458, %v459
        %v461 = vand.u32 %v460, 4294901760
        %462 = vmatprep.subr.mxu0 %v461
        %v463 = vand.u32 %v257, 4294901760
        %v464 = vsub.f32 %v257, %v463
        %v465 = vand.u32 %v464, 4294901760
        %v466 = vsub.f32 %v464, %v465
        %v467 = vand.u32 %v466, 4294901760
        %468 = vmatpush1.msra.mxu0 %v467
        %469 = vmatprep.subr.mxu0 0.0
        %470 = vmatpush1.msra.mxu0 0.0
        %471 = vmatprep.subr.mxu0 0.0
        %472 = vmatpush1.msra.mxu0 0.0
        %473 = vmatprep.subr.mxu0 0.0
        %474 = vmatpush1.msra.mxu0 0.0
        %475 = vmatprep.subr.mxu0 0.0
        %476 = vmatpush1.msra.mxu0 0.0
        %477 = vmatprep.subr.mxu0 0.0
        %478 = vmatpush1.msra.mxu0 0.0
        %479 = vmatprep.subr.mxu0 0.0
        %480 = vmatpush1.msra.mxu0 0.0
        %481 = vmatprep.subr.mxu0 0.0
        %482 = vmatpush1.msra.mxu0 0.0
        %483 = vmatprep.subr.mxu0 0.0
        %484 = vmatpush1.msra.mxu0 0.0
        %485 = vmatprep.subr.mxu0 0.0
        %486 = vmatpush1.msra.mxu0 0.0
        %487 = vmatprep.subr.mxu0 0.0
        %488 = vmatpush1.msra.mxu0 0.0
        %489 = vmatprep.subr.mxu0 0.0
        %490 = vmatpush1.msra.mxu0 0.0
        %491 = vmatprep.subr.mxu0 0.0
        %492 = vmatpush1.msra.mxu0 0.0
        %493 = vmatprep.subr.mxu0 0.0
        %494 = vmatpush1.msra.mxu0 0.0
        %495 = vmatprep.subr.mxu0 0.0
        %496 = vmatpush1.msra.mxu0 0.0
        %497 = vmatprep.subr.mxu0 0.0
        %498 = vmatpush1.msra.mxu0 0.0
        %499 = vmatprep.subr.mxu0 0.0
        %500 = vmatpush1.msra.mxu0 0.0
        %501 = vmatprep.subr.mxu0 0.0
        %502 = vmatpush1.msra.mxu0 0.0
        %503 = vmatprep.subr.mxu0 0.0
        %504 = vmatpush1.msra.mxu0 0.0
        %505 = vmatprep.subr.mxu0 0.0
        %506 = vmatpush1.msra.mxu0 0.0
        %507 = vmatprep.subr.mxu0 0.0
        %508 = vmatpush1.msra.mxu0 0.0
        %509 = vmatprep.subr.mxu0 0.0
        %510 = vmatpush1.msra.mxu0 0.0
        %511 = vmatprep.subr.mxu0 0.0
        %512 = vmatpush1.msra.mxu0 0.0
        %513 = vmatprep.subr.mxu0 0.0
        %514 = vmatpush1.msra.mxu0 0.0
        %515 = vmatprep.subr.mxu0 0.0
        %516 = vmatpush1.msra.mxu0 0.0
        %517 = vmatprep.subr.mxu0 0.0
        %518 = vmatpush1.msra.mxu0 0.0
        %519 = vmatprep.mubr.f32.mxu0 0.0
        %v520 = vand.u32 %v244, 4294901760
        %521 = vmatmul.mubr.f32.gmra.mrb[0].mxu0 %v520
        %v522 = vpop.f32.mrb[0].mxu0
        %v523 = vadd.f32 %v348, %v522
        %v524 = vpop.f32.mrb[0].mxu0
        %v525 = vadd.f32 %v350, %v524
        %526 = vmatprep.mubr.f32.mxu0 0.0
        %v527 = vand.u32 %v247, 4294901760
        %528 = vmatmul.mubr.f32.gmra.mrb[0].mxu0 %v527
        %v529 = vpop.f32.mrb[0].mxu0
        %v530 = vadd.f32 %v359, %v529
        %v531 = vpop.f32.mrb[0].mxu0
        %v532 = vadd.f32 %v361, %v531
        %533 = vmatprep.mubr.f32.mxu0 0.0
        %v534 = vand.u32 %v250, 4294901760
        %535 = vmatmul.mubr.f32.gmra.mrb[0].mxu0 %v534
        %v536 = vpop.f32.mrb[0].mxu0
        %v537 = vadd.f32 %v370, %v536
        %v538 = vpop.f32.mrb[0].mxu0
        %v539 = vadd.f32 %v372, %v538
        %540 = vmatprep.mubr.f32.mxu0 0.0
        %v541 = vand.u32 %v253, 4294901760
        %542 = vmatmul.mubr.f32.gmra.mrb[0].mxu0 %v541
        %v543 = vpop.f32.mrb[0].mxu0
        %v544 = vadd.f32 %v381, %v543
        %v545 = vpop.f32.mrb[0].mxu0
        %v546 = vadd.f32 %v383, %v545
        %547 = vdwg.mxu0
        %v548 = vand.u32 %v205, 4294901760
        %v549 = vsub.f32 %v205, %v548
        %550 = vmatprep.subr.mxu0 %v549
        %v551 = vand.u32 %v204, 4294901760
        %v552 = vsub.f32 %v204, %v551
        %553 = vmatpush1.msra.mxu0 %v552
        %v554 = vand.u32 %v207, 4294901760
        %v555 = vsub.f32 %v207, %v554
        %556 = vmatprep.subr.mxu0 %v555
        %v557 = vand.u32 %v206, 4294901760
        %v558 = vsub.f32 %v206, %v557
        %559 = vmatpush1.msra.mxu0 %v558
        %v560 = vand.u32 %v209, 4294901760
        %v561 = vsub.f32 %v209, %v560
        %562 = vmatprep.subr.mxu0 %v561
        %v563 = vand.u32 %v208, 4294901760
        %v564 = vsub.f32 %v208, %v563
        %565 = vmatpush1.msra.mxu0 %v564
        %v566 = vand.u32 %v211, 4294901760
        %v567 = vsub.f32 %v211, %v566
        %568 = vmatprep.subr.mxu0 %v567
        %v569 = vand.u32 %v210, 4294901760
        %v570 = vsub.f32 %v210, %v569
        %571 = vmatpush1.msra.mxu0 %v570
        %v572 = vand.u32 %v213, 4294901760
        %v573 = vsub.f32 %v213, %v572
        %574 = vmatprep.subr.mxu0 %v573
        %v575 = vand.u32 %v212, 4294901760
        %v576 = vsub.f32 %v212, %v575
        %577 = vmatpush1.msra.mxu0 %v576
        %v578 = vand.u32 %v215, 4294901760
        %v579 = vsub.f32 %v215, %v578
        %580 = vmatprep.subr.mxu0 %v579
        %v581 = vand.u32 %v214, 4294901760
        %v582 = vsub.f32 %v214, %v581
        %583 = vmatpush1.msra.mxu0 %v582
        %v584 = vand.u32 %v260, 4294901760
        %v585 = vsub.f32 %v260, %v584
        %586 = vmatprep.subr.mxu0 %v585
        %v587 = vand.u32 %v257, 4294901760
        %v588 = vsub.f32 %v257, %v587
        %589 = vmatpush1.msra.mxu0 %v588
        %590 = vmatprep.subr.mxu0 0.0
        %591 = vmatpush1.msra.mxu0 0.0
        %592 = vmatprep.subr.mxu0 0.0
        %593 = vmatpush1.msra.mxu0 0.0
        %594 = vmatprep.subr.mxu0 0.0
        %595 = vmatpush1.msra.mxu0 0.0
        %596 = vmatprep.subr.mxu0 0.0
        %597 = vmatpush1.msra.mxu0 0.0
        %598 = vmatprep.subr.mxu0 0.0
        %599 = vmatpush1.msra.mxu0 0.0
        %600 = vmatprep.subr.mxu0 0.0
        %601 = vmatpush1.msra.mxu0 0.0
        %602 = vmatprep.subr.mxu0 0.0
        %603 = vmatpush1.msra.mxu0 0.0
        %604 = vmatprep.subr.mxu0 0.0
        %605 = vmatpush1.msra.mxu0 0.0
        %606 = vmatprep.subr.mxu0 0.0
        %607 = vmatpush1.msra.mxu0 0.0
        %608 = vmatprep.subr.mxu0 0.0
        %609 = vmatpush1.msra.mxu0 0.0
        %610 = vmatprep.subr.mxu0 0.0
        %611 = vmatpush1.msra.mxu0 0.0
        %612 = vmatprep.subr.mxu0 0.0
        %613 = vmatpush1.msra.mxu0 0.0
        %614 = vmatprep.subr.mxu0 0.0
        %615 = vmatpush1.msra.mxu0 0.0
        %616 = vmatprep.subr.mxu0 0.0
        %617 = vmatpush1.msra.mxu0 0.0
        %618 = vmatprep.subr.mxu0 0.0
        %619 = vmatpush1.msra.mxu0 0.0
        %620 = vmatprep.subr.mxu0 0.0
        %621 = vmatpush1.msra.mxu0 0.0
        %622 = vmatprep.subr.mxu0 0.0
        %623 = vmatpush1.msra.mxu0 0.0
        %624 = vmatprep.subr.mxu0 0.0
        %625 = vmatpush1.msra.mxu0 0.0
        %626 = vmatprep.subr.mxu0 0.0
        %627 = vmatpush1.msra.mxu0 0.0
        %628 = vmatprep.subr.mxu0 0.0
        %629 = vmatpush1.msra.mxu0 0.0
        %630 = vmatprep.subr.mxu0 0.0
        %631 = vmatpush1.msra.mxu0 0.0
        %632 = vmatprep.subr.mxu0 0.0
        %633 = vmatpush1.msra.mxu0 0.0
        %634 = vmatprep.subr.mxu0 0.0
        %635 = vmatpush1.msra.mxu0 0.0
        %636 = vmatprep.subr.mxu0 0.0
        %637 = vmatpush1.msra.mxu0 0.0
        %638 = vmatprep.subr.mxu0 0.0
        %639 = vmatpush1.msra.mxu0 0.0
        %640 = vmatprep.mubr.f32.mxu0 0.0
        %v641 = vand.u32 %v244, 4294901760
        %v642 = vsub.f32 %v244, %v641
        %643 = vmatmul.mubr.f32.gmra.mrb[0].mxu0 %v642
        %v644 = vpop.f32.mrb[0].mxu0
        %v645 = vadd.f32 %v523, %v644
        %v646 = vpop.f32.mrb[0].mxu0
        %v647 = vadd.f32 %v525, %v646
        %648 = vmatprep.mubr.f32.mxu0 0.0
        %v649 = vand.u32 %v247, 4294901760
        %v650 = vsub.f32 %v247, %v649
        %651 = vmatmul.mubr.f32.gmra.mrb[0].mxu0 %v650
        %v652 = vpop.f32.mrb[0].mxu0
        %v653 = vadd.f32 %v530, %v652
        %v654 = vpop.f32.mrb[0].mxu0
        %v655 = vadd.f32 %v532, %v654
        %656 = vmatprep.mubr.f32.mxu0 0.0
        %v657 = vand.u32 %v250, 4294901760
        %v658 = vsub.f32 %v250, %v657
        %659 = vmatmul.mubr.f32.gmra.mrb[0].mxu0 %v658
        %v660 = vpop.f32.mrb[0].mxu0
        %v661 = vadd.f32 %v537, %v660
        %v662 = vpop.f32.mrb[0].mxu0
        %v663 = vadd.f32 %v539, %v662
        %664 = vmatprep.mubr.f32.mxu0 0.0
        %v665 = vand.u32 %v253, 4294901760
        %v666 = vsub.f32 %v253, %v665
        %667 = vmatmul.mubr.f32.gmra.mrb[0].mxu0 %v666
        %v668 = vpop.f32.mrb[0].mxu0
        %v669 = vadd.f32 %v544, %v668
        %v670 = vpop.f32.mrb[0].mxu0
        %v671 = vadd.f32 %v546, %v670
        %672 = vdwg.mxu0
        %v673 = vand.u32 %v205, 4294901760
        %674 = vmatprep.subr.mxu0 %v673
        %v675 = vand.u32 %v204, 4294901760
        %676 = vmatpush1.msra.mxu0 %v675
        %v677 = vand.u32 %v207, 4294901760
        %678 = vmatprep.subr.mxu0 %v677
        %v679 = vand.u32 %v206, 4294901760
        %680 = vmatpush1.msra.mxu0 %v679
        %v681 = vand.u32 %v209, 4294901760
        %682 = vmatprep.subr.mxu0 %v681
        %v683 = vand.u32 %v208, 4294901760
        %684 = vmatpush1.msra.mxu0 %v683
        %v685 = vand.u32 %v211, 4294901760
        %686 = vmatprep.subr.mxu0 %v685
        %v687 = vand.u32 %v210, 4294901760
        %688 = vmatpush1.msra.mxu0 %v687
        %v689 = vand.u32 %v213, 4294901760
        %690 = vmatprep.subr.mxu0 %v689
        %v691 = vand.u32 %v212, 4294901760
        %692 = vmatpush1.msra.mxu0 %v691
        %v693 = vand.u32 %v215, 4294901760
        %694 = vmatprep.subr.mxu0 %v693
        %v695 = vand.u32 %v214, 4294901760
        %696 = vmatpush1.msra.mxu0 %v695
        %v697 = vand.u32 %v260, 4294901760
        %698 = vmatprep.subr.mxu0 %v697
        %v699 = vand.u32 %v257, 4294901760
        %700 = vmatpush1.msra.mxu0 %v699
        %701 = vmatprep.subr.mxu0 0.0
        %702 = vmatpush1.msra.mxu0 0.0
        %703 = vmatprep.subr.mxu0 0.0
        %704 = vmatpush1.msra.mxu0 0.0
        %705 = vmatprep.subr.mxu0 0.0
        %706 = vmatpush1.msra.mxu0 0.0
        %707 = vmatprep.subr.mxu0 0.0
        %708 = vmatpush1.msra.mxu0 0.0
        %709 = vmatprep.subr.mxu0 0.0
        %710 = vmatpush1.msra.mxu0 0.0
        %711 = vmatprep.subr.mxu0 0.0
        %712 = vmatpush1.msra.mxu0 0.0
        %713 = vmatprep.subr.mxu0 0.0
        %714 = vmatpush1.msra.mxu0 0.0
        %715 = vmatprep.subr.mxu0 0.0
        %716 = vmatpush1.msra.mxu0 0.0
        %717 = vmatprep.subr.mxu0 0.0
        %718 = vmatpush1.msra.mxu0 0.0
        %719 = vmatprep.subr.mxu0 0.0
        %720 = vmatpush1.msra.mxu0 0.0
        %721 = vmatprep.subr.mxu0 0.0
        %722 = vmatpush1.msra.mxu0 0.0
        %723 = vmatprep.subr.mxu0 0.0
        %724 = vmatpush1.msra.mxu0 0.0
        %725 = vmatprep.subr.mxu0 0.0
        %726 = vmatpush1.msra.mxu0 0.0
        %727 = vmatprep.subr.mxu0 0.0
        %728 = vmatpush1.msra.mxu0 0.0
        %729 = vmatprep.subr.mxu0 0.0
        %730 = vmatpush1.msra.mxu0 0.0
        %731 = vmatprep.subr.mxu0 0.0
        %732 = vmatpush1.msra.mxu0 0.0
        %733 = vmatprep.subr.mxu0 0.0
        %734 = vmatpush1.msra.mxu0 0.0
        %735 = vmatprep.subr.mxu0 0.0
        %736 = vmatpush1.msra.mxu0 0.0
        %737 = vmatprep.subr.mxu0 0.0
        %738 = vmatpush1.msra.mxu0 0.0
        %739 = vmatprep.subr.mxu0 0.0
        %740 = vmatpush1.msra.mxu0 0.0
        %741 = vmatprep.subr.mxu0 0.0
        %742 = vmatpush1.msra.mxu0 0.0
        %743 = vmatprep.subr.mxu0 0.0
        %744 = vmatpush1.msra.mxu0 0.0
        %745 = vmatprep.subr.mxu0 0.0
        %746 = vmatpush1.msra.mxu0 0.0
        %747 = vmatprep.subr.mxu0 0.0
        %748 = vmatpush1.msra.mxu0 0.0
        %749 = vmatprep.subr.mxu0 0.0
        %750 = vmatpush1.msra.mxu0 0.0
        %751 = vmatprep.mubr.f32.mxu0 0.0
        %v752 = vand.u32 %v244, 4294901760
        %v753 = vsub.f32 %v244, %v752
        %v754 = vand.u32 %v753, 4294901760
        %755 = vmatmul.mubr.f32.gmra.mrb[0].mxu0 %v754
        %v756 = vpop.f32.mrb[0].mxu0
        %v757 = vadd.f32 %v645, %v756
        %v758 = vpop.f32.mrb[0].mxu0
        %v759 = vadd.f32 %v647, %v758
        %760 = vmatprep.mubr.f32.mxu0 0.0
        %v761 = vand.u32 %v247, 4294901760
        %v762 = vsub.f32 %v247, %v761
        %v763 = vand.u32 %v762, 4294901760
        %764 = vmatmul.mubr.f32.gmra.mrb[0].mxu0 %v763
        %v765 = vpop.f32.mrb[0].mxu0
        %v766 = vadd.f32 %v653, %v765
        %v767 = vpop.f32.mrb[0].mxu0
        %v768 = vadd.f32 %v655, %v767
        %769 = vmatprep.mubr.f32.mxu0 0.0
        %v770 = vand.u32 %v250, 4294901760
        %v771 = vsub.f32 %v250, %v770
        %v772 = vand.u32 %v771, 4294901760
        %773 = vmatmul.mubr.f32.gmra.mrb[0].mxu0 %v772
        %v774 = vpop.f32.mrb[0].mxu0
        %v775 = vadd.f32 %v661, %v774
        %v776 = vpop.f32.mrb[0].mxu0
        %v777 = vadd.f32 %v663, %v776
        %778 = vmatprep.mubr.f32.mxu0 0.0
        %v779 = vand.u32 %v253, 4294901760
        %v780 = vsub.f32 %v253, %v779
        %v781 = vand.u32 %v780, 4294901760
        %782 = vmatmul.mubr.f32.gmra.mrb[0].mxu0 %v781
        %v783 = vpop.f32.mrb[0].mxu0
        %v784 = vadd.f32 %v669, %v783
        %v785 = vpop.f32.mrb[0].mxu0
        %v786 = vadd.f32 %v671, %v785
        %787 = vdwg.mxu0
        %v788 = vand.u32 %v205, 4294901760
        %v789 = vsub.f32 %v205, %v788
        %v790 = vand.u32 %v789, 4294901760
        %791 = vmatprep.subr.mxu0 %v790
        %v792 = vand.u32 %v204, 4294901760
        %v793 = vsub.f32 %v204, %v792
        %v794 = vand.u32 %v793, 4294901760
        %795 = vmatpush1.msra.mxu0 %v794
        %v796 = vand.u32 %v207, 4294901760
        %v797 = vsub.f32 %v207, %v796
        %v798 = vand.u32 %v797, 4294901760
        %799 = vmatprep.subr.mxu0 %v798
        %v800 = vand.u32 %v206, 4294901760
        %v801 = vsub.f32 %v206, %v800
        %v802 = vand.u32 %v801, 4294901760
        %803 = vmatpush1.msra.mxu0 %v802
        %v804 = vand.u32 %v209, 4294901760
        %v805 = vsub.f32 %v209, %v804
        %v806 = vand.u32 %v805, 4294901760
        %807 = vmatprep.subr.mxu0 %v806
        %v808 = vand.u32 %v208, 4294901760
        %v809 = vsub.f32 %v208, %v808
        %v810 = vand.u32 %v809, 4294901760
        %811 = vmatpush1.msra.mxu0 %v810
        %v812 = vand.u32 %v211, 4294901760
        %v813 = vsub.f32 %v211, %v812
        %v814 = vand.u32 %v813, 4294901760
        %815 = vmatprep.subr.mxu0 %v814
        %v816 = vand.u32 %v210, 4294901760
        %v817 = vsub.f32 %v210, %v816
        %v818 = vand.u32 %v817, 4294901760
        %819 = vmatpush1.msra.mxu0 %v818
        %v820 = vand.u32 %v213, 4294901760
        %v821 = vsub.f32 %v213, %v820
        %v822 = vand.u32 %v821, 4294901760
        %823 = vmatprep.subr.mxu0 %v822
        %v824 = vand.u32 %v212, 4294901760
        %v825 = vsub.f32 %v212, %v824
        %v826 = vand.u32 %v825, 4294901760
        %827 = vmatpush1.msra.mxu0 %v826
        %v828 = vand.u32 %v215, 4294901760
        %v829 = vsub.f32 %v215, %v828
        %v830 = vand.u32 %v829, 4294901760
        %831 = vmatprep.subr.mxu0 %v830
        %v832 = vand.u32 %v214, 4294901760
        %v833 = vsub.f32 %v214, %v832
        %v834 = vand.u32 %v833, 4294901760
        %835 = vmatpush1.msra.mxu0 %v834
        %v836 = vand.u32 %v260, 4294901760
        %v837 = vsub.f32 %v260, %v836
        %v838 = vand.u32 %v837, 4294901760
        %839 = vmatprep.subr.mxu0 %v838
        %v840 = vand.u32 %v257, 4294901760
        %v841 = vsub.f32 %v257, %v840
        %v842 = vand.u32 %v841, 4294901760
        %843 = vmatpush1.msra.mxu0 %v842
        %844 = vmatprep.subr.mxu0 0.0
        %845 = vmatpush1.msra.mxu0 0.0
        %846 = vmatprep.subr.mxu0 0.0
        %847 = vmatpush1.msra.mxu0 0.0
        %848 = vmatprep.subr.mxu0 0.0
        %849 = vmatpush1.msra.mxu0 0.0
        %850 = vmatprep.subr.mxu0 0.0
        %851 = vmatpush1.msra.mxu0 0.0
        %852 = vmatprep.subr.mxu0 0.0
        %853 = vmatpush1.msra.mxu0 0.0
        %854 = vmatprep.subr.mxu0 0.0
        %855 = vmatpush1.msra.mxu0 0.0
        %856 = vmatprep.subr.mxu0 0.0
        %857 = vmatpush1.msra.mxu0 0.0
        %858 = vmatprep.subr.mxu0 0.0
        %859 = vmatpush1.msra.mxu0 0.0
        %860 = vmatprep.subr.mxu0 0.0
        %861 = vmatpush1.msra.mxu0 0.0
        %862 = vmatprep.subr.mxu0 0.0
        %863 = vmatpush1.msra.mxu0 0.0
        %864 = vmatprep.subr.mxu0 0.0
        %865 = vmatpush1.msra.mxu0 0.0
        %866 = vmatprep.subr.mxu0 0.0
        %867 = vmatpush1.msra.mxu0 0.0
        %868 = vmatprep.subr.mxu0 0.0
        %869 = vmatpush1.msra.mxu0 0.0
        %870 = vmatprep.subr.mxu0 0.0
        %871 = vmatpush1.msra.mxu0 0.0
        %872 = vmatprep.subr.mxu0 0.0
        %873 = vmatpush1.msra.mxu0 0.0
        %874 = vmatprep.subr.mxu0 0.0
        %875 = vmatpush1.msra.mxu0 0.0
        %876 = vmatprep.subr.mxu0 0.0
        %877 = vmatpush1.msra.mxu0 0.0
        %878 = vmatprep.subr.mxu0 0.0
        %879 = vmatpush1.msra.mxu0 0.0
        %880 = vmatprep.subr.mxu0 0.0
        %881 = vmatpush1.msra.mxu0 0.0
        %882 = vmatprep.subr.mxu0 0.0
        %883 = vmatpush1.msra.mxu0 0.0
        %884 = vmatprep.subr.mxu0 0.0
        %885 = vmatpush1.msra.mxu0 0.0
        %886 = vmatprep.subr.mxu0 0.0
        %887 = vmatpush1.msra.mxu0 0.0
        %888 = vmatprep.subr.mxu0 0.0
        %889 = vmatpush1.msra.mxu0 0.0
        %890 = vmatprep.subr.mxu0 0.0
        %891 = vmatpush1.msra.mxu0 0.0
        %892 = vmatprep.subr.mxu0 0.0
        %893 = vmatpush1.msra.mxu0 0.0
        %894 = vmatprep.mubr.f32.mxu0 0.0
        %v895 = vand.u32 %v244, 4294901760
        %896 = vmatmul.mubr.f32.gmra.mrb[0].mxu0 %v895
        %v897 = vpop.f32.mrb[0].mxu0
        %v898 = vadd.f32 %v757, %v897
        %v899 = vpop.f32.mrb[0].mxu0
        %v900 = vadd.f32 %v759, %v899
        %901 = vmatprep.mubr.f32.mxu0 0.0
        %v902 = vand.u32 %v247, 4294901760
        %903 = vmatmul.mubr.f32.gmra.mrb[0].mxu0 %v902
        %v904 = vpop.f32.mrb[0].mxu0
        %v905 = vadd.f32 %v766, %v904
        %v906 = vpop.f32.mrb[0].mxu0
        %v907 = vadd.f32 %v768, %v906
        %908 = vmatprep.mubr.f32.mxu0 0.0
        %v909 = vand.u32 %v250, 4294901760
        %910 = vmatmul.mubr.f32.gmra.mrb[0].mxu0 %v909
        %v911 = vpop.f32.mrb[0].mxu0
        %v912 = vadd.f32 %v775, %v911
        %v913 = vpop.f32.mrb[0].mxu0
        %v914 = vadd.f32 %v777, %v913
        %915 = vmatprep.mubr.f32.mxu0 0.0
        %v916 = vand.u32 %v253, 4294901760
        %917 = vmatmul.mubr.f32.gmra.mrb[0].mxu0 %v916
        %v918 = vpop.f32.mrb[0].mxu0
        %v919 = vadd.f32 %v784, %v918
        %v920 = vpop.f32.mrb[0].mxu0
        %v921 = vadd.f32 %v786, %v920
        %922 = vdwg.mxu0
        %v923 = vand.u32 %v205, 4294901760
        %924 = vmatprep.subr.mxu0 %v923
        %v925 = vand.u32 %v204, 4294901760
        %926 = vmatpush1.msra.mxu0 %v925
        %v927 = vand.u32 %v207, 4294901760
        %928 = vmatprep.subr.mxu0 %v927
        %v929 = vand.u32 %v206, 4294901760
        %930 = vmatpush1.msra.mxu0 %v929
        %v931 = vand.u32 %v209, 4294901760
        %932 = vmatprep.subr.mxu0 %v931
        %v933 = vand.u32 %v208, 4294901760
        %934 = vmatpush1.msra.mxu0 %v933
        %v935 = vand.u32 %v211, 4294901760
        %936 = vmatprep.subr.mxu0 %v935
        %v937 = vand.u32 %v210, 4294901760
        %938 = vmatpush1.msra.mxu0 %v937
        %v939 = vand.u32 %v213, 4294901760
        %940 = vmatprep.subr.mxu0 %v939
        %v941 = vand.u32 %v212, 4294901760
        %942 = vmatpush1.msra.mxu0 %v941
        %v943 = vand.u32 %v215, 4294901760
        %944 = vmatprep.subr.mxu0 %v943
        %v945 = vand.u32 %v214, 4294901760
        %946 = vmatpush1.msra.mxu0 %v945
        %v947 = vand.u32 %v260, 4294901760
        %948 = vmatprep.subr.mxu0 %v947
        %v949 = vand.u32 %v257, 4294901760
        %950 = vmatpush1.msra.mxu0 %v949
        %951 = vmatprep.subr.mxu0 0.0
        %952 = vmatpush1.msra.mxu0 0.0
        %953 = vmatprep.subr.mxu0 0.0
        %954 = vmatpush1.msra.mxu0 0.0
        %955 = vmatprep.subr.mxu0 0.0
        %956 = vmatpush1.msra.mxu0 0.0
        %957 = vmatprep.subr.mxu0 0.0
        %958 = vmatpush1.msra.mxu0 0.0
        %959 = vmatprep.subr.mxu0 0.0
        %960 = vmatpush1.msra.mxu0 0.0
        %961 = vmatprep.subr.mxu0 0.0
        %962 = vmatpush1.msra.mxu0 0.0
        %963 = vmatprep.subr.mxu0 0.0
        %964 = vmatpush1.msra.mxu0 0.0
        %965 = vmatprep.subr.mxu0 0.0
        %966 = vmatpush1.msra.mxu0 0.0
        %967 = vmatprep.subr.mxu0 0.0
        %968 = vmatpush1.msra.mxu0 0.0
        %969 = vmatprep.subr.mxu0 0.0
        %970 = vmatpush1.msra.mxu0 0.0
        %971 = vmatprep.subr.mxu0 0.0
        %972 = vmatpush1.msra.mxu0 0.0
        %973 = vmatprep.subr.mxu0 0.0
        %974 = vmatpush1.msra.mxu0 0.0
        %975 = vmatprep.subr.mxu0 0.0
        %976 = vmatpush1.msra.mxu0 0.0
        %977 = vmatprep.subr.mxu0 0.0
        %978 = vmatpush1.msra.mxu0 0.0
        %979 = vmatprep.subr.mxu0 0.0
        %980 = vmatpush1.msra.mxu0 0.0
        %981 = vmatprep.subr.mxu0 0.0
        %982 = vmatpush1.msra.mxu0 0.0
        %983 = vmatprep.subr.mxu0 0.0
        %984 = vmatpush1.msra.mxu0 0.0
        %985 = vmatprep.subr.mxu0 0.0
        %986 = vmatpush1.msra.mxu0 0.0
        %987 = vmatprep.subr.mxu0 0.0
        %988 = vmatpush1.msra.mxu0 0.0
        %989 = vmatprep.subr.mxu0 0.0
        %990 = vmatpush1.msra.mxu0 0.0
        %991 = vmatprep.subr.mxu0 0.0
        %992 = vmatpush1.msra.mxu0 0.0
        %993 = vmatprep.subr.mxu0 0.0
        %994 = vmatpush1.msra.mxu0 0.0
        %995 = vmatprep.subr.mxu0 0.0
        %996 = vmatpush1.msra.mxu0 0.0
        %997 = vmatprep.subr.mxu0 0.0
        %998 = vmatpush1.msra.mxu0 0.0
        %999 = vmatprep.subr.mxu0 0.0
        %1000 = vmatpush1.msra.mxu0 0.0
        %1001 = vmatprep.mubr.f32.mxu0 0.0
        %v1002 = vand.u32 %v244, 4294901760
        %1003 = vmatmul.mubr.f32.gmra.mrb[0].mxu0 %v1002
        %v1004 = vpop.f32.mrb[0].mxu0
        %v1005 = vadd.f32 %v898, %v1004
        %v1006 = vpop.f32.mrb[0].mxu0
        %v1007 = vadd.f32 %v900, %v1006
        %1008 = vmatprep.mubr.f32.mxu0 0.0
        %v1009 = vand.u32 %v247, 4294901760
        %1010 = vmatmul.mubr.f32.gmra.mrb[0].mxu0 %v1009
        %v1011 = vpop.f32.mrb[0].mxu0
        %v1012 = vadd.f32 %v905, %v1011
        %v1013 = vpop.f32.mrb[0].mxu0
        %v1014 = vadd.f32 %v907, %v1013
        %1015 = vmatprep.mubr.f32.mxu0 0.0
        %v1016 = vand.u32 %v250, 4294901760
        %1017 = vmatmul.mubr.f32.gmra.mrb[0].mxu0 %v1016
        %v1018 = vpop.f32.mrb[0].mxu0
        %v1019 = vadd.f32 %v912, %v1018
        %v1020 = vpop.f32.mrb[0].mxu0
        %v1021 = vadd.f32 %v914, %v1020
        %1022 = vmatprep.mubr.f32.mxu0 0.0
        %v1023 = vand.u32 %v253, 4294901760
        %1024 = vmatmul.mubr.f32.gmra.mrb[0].mxu0 %v1023
        %v1025 = vpop.f32.mrb[0].mxu0
        %v1026 = vadd.f32 %v919, %v1025
        %v1027 = vpop.f32.mrb[0].mxu0
        %v1028 = vadd.f32 %v921, %v1027
        %1029 = vdwg.mxu0
        %v1030 = vmax.f32 %v1005, 0.0
        %v1031 = vmax.f32 %v1007, 0.0
        %v1032 = vmax.f32 %v1012, 0.0
        %v1033 = vmax.f32 %v1014, 0.0
        %v1034 = vmax.f32 %v1019, 0.0
        %v1035 = vmax.f32 %v1021, 0.0
        %v1036 = vmax.f32 %v1026, 0.0
        %v1037 = vmax.f32 %v1028, 0.0
        %1038 = vst [vmem:[%s188] sm:$0xff] %v1030
        %1039 = vst [vmem:[%s188 + $0x8] sm:$0xff] %v1031
        %1040 = vst [vmem:[%s188 + $0x10] sm:$0xff] %v1032
        %1041 = vst [vmem:[%s188 + $0x18] sm:$0xff] %v1033
        %1042 = vst [vmem:[%s188 + $0x20] sm:$0xff] %v1034
        %1043 = vst [vmem:[%s188 + $0x28] sm:$0xff] %v1035
        %1044 = vst [vmem:[%s188 + $0x30] sm:$0xff] %v1036
        %1045 = vst [vmem:[%s188 + $0x38] sm:$0xff] %v1037
        %s1046 = sand.u32 %s109, 1
        %s1047 = scalar_lea.sflag [#allocation3], %s1046
        %s1048 = sand.u32 %s109, 1
        %s1049 = smul.addr %s1048, 64
        %s1050 = scalar_lea.vmem [#allocation2], %s1049
        // Predicated region
        $region33: #{tpu_custom_call.1} parent=31 // pred_check
          %p1051 = pneg %p119
        $region34: #{tpu_custom_call.1} parent=31 // pred_check_branch
          %1053 = sbr.rel (%p1051) target = $region36
        $region35: #{tpu_custom_call.1} parent=31 // pred_region
          %s1054 = smul.u32 2, %s22
          %s1056 = ssub.s32 1024, 1024
          %1057 = vsyncadd %s1047, %s1056
          %s1058 = smul.addr %s21, 8
          %s1059 = sadd.s32 %s1054, %s1058
          %s1060 = smul.addr %s1059, 128
          %s1061 = scalar_lea.hbm %s3, %s1060
          %s1062 = sshll.u32 %s1050, 4
          %s1063 = int_to_ptr.vmem [resolvable:$true] %s1062
          %1068 = dma.vmem_to_hbm [thread:$0]  %s1063, 1024, %s1061, %s1047, 256, 256, 16
        $region36: #{tpu_custom_call.1} parent=31 // pred_fallthru
          _
      $region32: #{tpu_custom_call.1} parent=5 // pred_fallthru
        _
      %p1069 = scmp.le.s32.totalorder 2, %s12
      // Predicated region
      $region37: #{tpu_custom_call.1} parent=5 // pred_check
        %p1070 = pneg %p1069
      $region38: #{tpu_custom_call.1} parent=5 // pred_check_branch
        %1072 = sbr.rel (%p1070) target = $region40
      $region39: #{tpu_custom_call.1} parent=5 // pred_region
        %s1073 = ssub.s32 %s12, 2
        // Predicated region
        $region41: #{tpu_custom_call.1} parent=39 // pred_check
          %p1074 = pneg %p125
        $region42: #{tpu_custom_call.1} parent=39 // pred_check_branch
          %1076 = sbr.rel (%p1074) target = $region44
        $region43: #{tpu_custom_call.1} parent=39 // pred_region
          %s1077 = sand.u32 %s110, 1
          %s1078 = scalar_lea.sflag [#allocation3], %s1077
          %s1079 = sand.u32 %s110, 1
          %s1080 = smul.addr %s1079, 64
          %s1081 = scalar_lea.vmem [#allocation2], %s1080
          %1082 = dma.done %s1078, 1024
        $region44: #{tpu_custom_call.1} parent=39 // pred_fallthru
          _
      $region40: #{tpu_custom_call.1} parent=5 // pred_fallthru
        _
    $region6: #{tpu_custom_call.1} parent=1 // loop_footer
      %s16 = sadd.s32 1, %s12
    $region7: #{tpu_custom_call.1} parent=1 // loop_footer_branch
      %11 = sbr.rel target = $region3
    $region8: #{tpu_custom_call.1} parent=1 // loop_exit
      _
    %1083 = vsyncpa [#allocation3], 1
    %s1084 = scalar_lea.sflag [#allocation3], 1
    %1085 = vsyncpa %s1084, 1

</llo_original>
